<compile_context>
chip_gen: v7x
topology: tpu7x:2x2x1
jax: 0.10.0
libtpu: 0.0.40
codegen_flags: <defaults>
</compile_context>

<pallas_src>
import jax
import jax.numpy as jnp
from jax.experimental import pallas as pl
from jax.experimental.pallas import tpu as pltpu


def _round_up(a: int, b: int) -> int:
    return ((a + b - 1) // b) * b


def _make_kernel(tk: int, grid_k: int, k_rem: int):
    """Build the fused (x @ w + b) * exp(-log_T) kernel for static tiling params."""

    def kernel(log_t_ref, x_ref, w_ref, b_ref, o_ref):
        # log_t_ref : SMEM (1,)        f32  -- log-temperature, resident all steps
        # x_ref     : VMEM (tm, tk)    f32  -- input-feature tile (cast to bf16 here)
        # w_ref     : VMEM (F_pad, C)  bf16 -- FULL weight matrix, fetched once
        # b_ref     : VMEM (1, C)      f32  -- bias (zero in padded class columns)
        # o_ref     : VMEM (tm, C)     f32  -- output tile; doubles as K accumulator
        k = pl.program_id(1)

        @pl.when(k == 0)
        def _init():
            # Bias-initialize the resident output tile (replaces a separate
            # accumulator scratch + finalize add).
            o_ref[...] = jnp.broadcast_to(b_ref[...], o_ref.shape)

        x = x_ref[...]
        if k_rem:  # static: only emitted when F % tk != 0
            # Mask the unspecified K-tail of the last x block so garbage
            # (possibly NaN/Inf) never reaches the MXU.
            col = jax.lax.broadcasted_iota(jnp.int32, x.shape, 1)
            x = jnp.where((k < grid_k - 1) | (col < k_rem), x, 0.0)

        # Cast to bf16 in-kernel (VPU slot has slack); x stays f32 in HBM so
        # there is no extra wrapper-side cast/pad pass over it.
        x_bf16 = x.astype(jnp.bfloat16)
        start = pl.multiple_of(k * tk, tk)
        w_k = w_ref[pl.ds(start, tk), :]
        o_ref[...] += jnp.dot(x_bf16, w_k, preferred_element_type=jnp.float32)

        @pl.when(k == grid_k - 1)
        def _finalize():
            # logits / exp(log_T) == logits * exp(-log_T); one EUP exp per m-tile.
            o_ref[...] *= jnp.exp(-log_t_ref[0])

    return kernel


def model_with_temperature(x_nchw, w, b, log_T, *, tm=512, tk=2048):
    """Forward pass of ModelWithTemperature: model(x) then temperature_scale."""
    B = x_nchw.shape[0]
    F, num_classes = w.shape

    # Flatten NCHW row-major, same as torch .view(B, -1).  Kept in f32: the
    # kernel reads it directly from HBM (no wrapper cast/pad pass).
    feat = x_nchw.reshape(B, -1).astype(jnp.float32)

    # --- layout / tiling decisions -------------------------------------------
    # Lane-dense class dim: pad to a multiple of 128 (padded cols are zero).
    C = _round_up(num_classes, 128)

    # K tile: multiple of 128 lanes, no larger than the 128-rounded feature dim.
    tk = max(128, min(_round_up(tk, 128), _round_up(F, 128)))
    F_pad = _round_up(F, tk)
    grid_k = F_pad // tk
    k_rem = F % tk  # 0 => no tail-masking code is emitted

    # M tile: multiple of 8 sublanes; don't over-pad tiny batches, but if one
    # tile would swallow a large batch, halve it so grid_m >= 2 and the
    # "parallel" axis can use both TensorCores on v7x.
    B_ceil = _round_up(B, 8)
    tm = max(8, min(_round_up(tm, 8), B_ceil))
    if tm >= B_ceil and B_ceil >= 32:
        tm = _round_up(B_ceil, 16) // 2
    grid_m = pl.cdiv(B, tm)

    # w / b are tiny relative to x: pad + cast once in the wrapper.
    # NOTE: w is kept fully VMEM-resident; this assumes a classifier-head sized
    # F (<= a few tens of K features at C=128), which easily fits all gens.
    w_p = jnp.pad(w.astype(jnp.bfloat16), ((0, F_pad - F), (0, C - num_classes)))
    b_p = jnp.pad(b.astype(jnp.float32).reshape(1, num_classes),
                  ((0, 0), (0, C - num_classes)))
    log_T_f32 = log_T.astype(jnp.float32).reshape(1)

    # Rough VMEM working set: double-buffered x tile + (double-buffered)
    # resident w + resident output tile + bias.
    vmem_bytes = (2 * tm * tk * 4) + (2 * F_pad * C * 2) + (2 * tm * C * 4) + (2 * C * 4)
    vmem_limit = int(min(max(vmem_bytes + (4 << 20), 16 << 20), 40 << 20))

    cost = pl.CostEstimate(
        flops=2 * grid_m * tm * F_pad * C,
        transcendentals=grid_m,                      # one exp per output tile
        bytes_accessed=(B * F * 4                    # x read once, f32
                        + F_pad * C * 2              # w fetched once (resident)
                        + C * 4                      # bias
                        + B * C * 4),                # f32 logits writeback
    )

    kernel = _make_kernel(tk, grid_k, k_rem)

    out = pl.pallas_call(
        kernel,
        out_shape=jax.ShapeDtypeStruct((B, C), jnp.float32),
        grid_spec=pltpu.PrefetchScalarGridSpec(
            num_scalar_prefetch=0,
            grid=(grid_m, grid_k),
            in_specs=[
                # log_T: whole (1,) array resident in SMEM across grid steps.
                pl.BlockSpec(memory_space=pltpu.MemorySpace.SMEM),
                pl.BlockSpec((tm, tk), lambda i, k: (i, k)),    # x tile (f32)
                pl.BlockSpec((F_pad, C), lambda i, k: (0, 0)),  # w: fully resident
                pl.BlockSpec((1, C), lambda i, k: (0, 0)),      # bias: resident
            ],
            out_specs=pl.BlockSpec((tm, C), lambda i, k: (i, 0)),
        ),
        compiler_params=pltpu.CompilerParams(
            dimension_semantics=("parallel", "arbitrary"),
            vmem_limit_bytes=vmem_limit,
        ),
        cost_estimate=cost,
    )(log_T_f32, feat, w_p, b_p)

    # Padded weight/bias columns are zero, so nothing leaks before the slice.
    return out[:, :num_classes]


if __name__ == "__main__":
    # Small, deterministic example shapes.
    B, C_in, H, W = 2, 4, 16, 16
    NUM_CLASSES = 10
    FEAT = C_in * H * W

    key = jax.random.PRNGKey(0)
    kx, kw, kb = jax.random.split(key, 3)

    x = jax.random.normal(kx, (B, C_in, H, W), dtype=jnp.float32)
    # Deterministic synthetic "pretrained model" parameters.
    w = jax.random.normal(kw, (FEAT, NUM_CLASSES), dtype=jnp.float32) * 0.02
    b = jax.random.normal(kb, (1, NUM_CLASSES), dtype=jnp.float32) * 0.1
    # nn.Parameter(torch.zeros(1)) -> log_T initialized to 0 (T = 1).
    log_T = jnp.zeros((1,), dtype=jnp.float32)

    out = model_with_temperature(x, w, b, log_T)
    out = jax.block_until_ready(out)

    # Pure-JAX reference with matched numerics (bf16-rounded operands, f32 accum).
    feat_f = x.reshape(B, -1).astype(jnp.bfloat16).astype(jnp.float32)
    w_f = w.astype(jnp.bfloat16).astype(jnp.float32)
    ref = (feat_f @ w_f + b) / jnp.exp(log_T[0])

    assert out.shape == (B, NUM_CLASSES)
    assert jnp.allclose(out, ref, atol=5e-3, rtol=5e-3), "mismatch vs reference"

    # TODO(synk): compute_ece / set_temperature (LBFGS fit) are host-side
    # training/eval utilities, not part of the forward pass; not implemented here.

    print("KERNEL_OK")
</pallas_src>

<mosaic_0001>
module attributes {stable_mosaic.version = 11 : i64} {
  func.func @kernel(%arg0: i32, %arg1: i32, %arg2: memref<1xf32, #tpu.memory_space<smem>>, %arg3: memref<8x1024xf32, #tpu.memory_space<vmem>>, %arg4: memref<1024x128xbf16, #tpu.memory_space<vmem>>, %arg5: memref<1x128xf32, #tpu.memory_space<vmem>>, %arg6: memref<8x128xf32, #tpu.memory_space<vmem>>) attributes {dimension_semantics = [#tpu.dimension_semantics<parallel>, #tpu.dimension_semantics<arbitrary>], iteration_bounds = array<i64: 1, 1>, scalar_prefetch = 0 : i64, scratch_operands = 0 : i64, tpu.core_type = #tpu.core_type<tc>, window_params = [{transform_indices = @transform_0, window_bounds = array<i64: 1>}, {transform_indices = @transform_1, window_bounds = array<i64: 8, 1024>}, {pipeline_mode = #tpu.pipeline_mode<synchronous>, transform_indices = @transform_2, window_bounds = array<i64: 1024, 128>}, {pipeline_mode = #tpu.pipeline_mode<synchronous>, transform_indices = @transform_3, window_bounds = array<i64: 1, 128>}, {transform_indices = @transform_4, window_bounds = array<i64: 8, 128>}]} {
    %c0_i32 = arith.constant 0 : i32
    %0 = arith.cmpi eq, %arg1, %c0_i32 : i32
    %1 = arith.extui %0 : i1 to i32
    %c0_i32_0 = arith.constant 0 : i32
    %2 = arith.cmpi ne, %1, %c0_i32_0 : i32
    scf.if %2 {
      %c0_9 = arith.constant 0 : index
      %c0_10 = arith.constant 0 : index
      %16 = vector.load %arg5[%c0_9, %c0_10] : memref<1x128xf32, #tpu.memory_space<vmem>>, vector<1x128xf32>
      %17 = vector.shape_cast %16 : vector<1x128xf32> to vector<1x128xf32>
      %18 = vector.broadcast %17 : vector<1x128xf32> to vector<8x128xf32>
      %c0_11 = arith.constant 0 : index
      %c0_12 = arith.constant 0 : index
      %19 = vector.load %arg6[%c0_11, %c0_12] : memref<8x128xf32, #tpu.memory_space<vmem>>, vector<8x128xf32>
      tpu.vector_store %arg6[%c0_11, %c0_12], %18 {strides = array<i32>} : memref<8x128xf32, #tpu.memory_space<vmem>>, vector<8x128xf32>,
    } else {
    }
    %c0 = arith.constant 0 : index
    %c0_1 = arith.constant 0 : index
    %3 = vector.load %arg3[%c0, %c0_1] : memref<8x1024xf32, #tpu.memory_space<vmem>>, vector<8x1024xf32>
    %4 = arith.truncf %3 : vector<8x1024xf32> to vector<8x1024xbf16>
    %c1024_i32 = arith.constant 1024 : i32
    %5 = arith.muli %arg1, %c1024_i32 : i32
    %6 = tpu.assume_multiple %5, 1024 : i32
    %7 = arith.index_cast %6 : i32 to index
    %c0_2 = arith.constant 0 : index
    %8 = vector.load %arg4[%7, %c0_2] : memref<1024x128xbf16, #tpu.memory_space<vmem>>, vector<1024x128xbf16>
    %c0_3 = arith.constant 0 : index
    %c0_4 = arith.constant 0 : index
    %9 = vector.load %arg6[%c0_3, %c0_4] : memref<8x128xf32, #tpu.memory_space<vmem>>, vector<8x128xf32>
    %cst = arith.constant dense<0.000000e+00> : vector<8x128xf32>
    %10 = tpu.matmul %4, %8, %cst {dimension_numbers = #tpu.dot_dimension_numbers<[1], [0], [0], [1], [0, 0, 1, 1], [], []>} : vector<8x1024xbf16>, vector<1024x128xbf16>, vector<8x128xf32> -> vector<8x128xf32>
    %11 = arith.addf %9, %10 : vector<8x128xf32>
    %c0_5 = arith.constant 0 : index
    %c0_6 = arith.constant 0 : index
    %12 = vector.load %arg6[%c0_5, %c0_6] : memref<8x128xf32, #tpu.memory_space<vmem>>, vector<8x128xf32>
    tpu.vector_store %arg6[%c0_5, %c0_6], %11 {strides = array<i32>} : memref<8x128xf32, #tpu.memory_space<vmem>>, vector<8x128xf32>,
    %c0_i32_7 = arith.constant 0 : i32
    %13 = arith.cmpi eq, %arg1, %c0_i32_7 : i32
    %14 = arith.extui %13 : i1 to i32
    %c0_i32_8 = arith.constant 0 : i32
    %15 = arith.cmpi ne, %14, %c0_i32_8 : i32
    scf.if %15 {
      %c0_9 = arith.constant 0 : index
      %c0_10 = arith.constant 0 : index
      %16 = vector.load %arg6[%c0_9, %c0_10] : memref<8x128xf32, #tpu.memory_space<vmem>>, vector<8x128xf32>
      %c0_11 = arith.constant 0 : index
      %17 = memref.load %arg2[%c0_11] : memref<1xf32, #tpu.memory_space<smem>>
      %cst_12 = arith.constant 0.000000e+00 : f32
      %18 = arith.subf %cst_12, %17 : f32
      %19 = math.exp %18 : f32
      %20 = vector.broadcast %19 : f32 to vector<8x128xf32>
      %21 = arith.mulf %16, %20 : vector<8x128xf32>
      %c0_13 = arith.constant 0 : index
      %c0_14 = arith.constant 0 : index
      %22 = vector.load %arg6[%c0_13, %c0_14] : memref<8x128xf32, #tpu.memory_space<vmem>>, vector<8x128xf32>
      tpu.vector_store %arg6[%c0_13, %c0_14], %21 {strides = array<i32>} : memref<8x128xf32, #tpu.memory_space<vmem>>, vector<8x128xf32>,
    } else {
    }
    return
  }
  func.func @transform_0(%arg0: i32, %arg1: i32) -> i32 {
    %c0_i32 = arith.constant 0 : i32
    %c0_i32_0 = arith.constant 0 : i32
    return %c0_i32 : i32
  }
  func.func @transform_1(%arg0: i32, %arg1: i32) -> (i32, i32) {
    %c0_i32 = arith.constant 0 : i32
    return %arg0, %arg1 : i32, i32
  }
  func.func @transform_2(%arg0: i32, %arg1: i32) -> (i32, i32) {
    %c0_i32 = arith.constant 0 : i32
    %c0_i32_0 = arith.constant 0 : i32
    %c0_i32_1 = arith.constant 0 : i32
    return %c0_i32, %c0_i32_0 : i32, i32
  }
  func.func @transform_3(%arg0: i32, %arg1: i32) -> (i32, i32) {
    %c0_i32 = arith.constant 0 : i32
    %c0_i32_0 = arith.constant 0 : i32
    %c0_i32_1 = arith.constant 0 : i32
    return %c0_i32, %c0_i32_0 : i32, i32
  }
  func.func @transform_4(%arg0: i32, %arg1: i32) -> (i32, i32) {
    %c0_i32 = arith.constant 0 : i32
    %c0_i32_0 = arith.constant 0 : i32
    return %arg0, %c0_i32 : i32, i32
  }
}

</mosaic_0001>

<llo_original>
// kernel: tpu_custom_call.1
$region0: #{tpu_custom_call.1}
  #allocation0 [shape = 'u32[]', space=smem, size = 0x4, offset = 0x4, fixed_abs, tag = 'smem constant byte address 0x4 - core index']
  #allocation1 [shape = 'u32[144,128]{1,0:T(1,128)}', space=vmem, size = 0x12000, scoped, tag = 'internal scratch']
  #allocation2 [shape = 'f32[1]{0:T(128)S(6)}', space=smem, size = 0x200, scoped, tag = 'scoped memory for tpu_custom_call.1']
  %s0 = inlined_call_operand.<no memory space> [shape: f32[1], index: 0, kind: input, shape index: {}]
  %s1 = inlined_call_operand.hbm [shape: f32[2,1024], index: 1, kind: input, shape index: {}]
  %s2 = inlined_call_operand.hbm [shape: bf16[1024,128], index: 2, kind: input, shape index: {}]
  %s3 = inlined_call_operand.vmem [shape: f32[1,128], index: 3, kind: input, shape index: {}]
  %s4 = inlined_call_operand.hbm [shape: f32[2,128], index: 4, kind: output, shape index: {}]
  %s5 = sld [smem:[#allocation0]]
  $region42: #{tpu_custom_call.1} parent=0
    _
  %s7 = ssub.s32 1, %s5
  %s8 = scalar_select 0, %s7, %s5
  %9 = sst [smem:[#allocation2]] %s0
  $region1: #{tpu_custom_call.1} parent=0
    #allocation3 [shape = 'u8[32768]{0}', space=vmem, size = 0x8000, scoped, tag = 'input window, operand 1, single buffered']
    #allocation4 [shape = 's32[1]{0}', space=sflag, size = 0x4, scoped, tag = 'scoped memory for tpu_custom_call.1']
    #allocation5 [shape = 's32[1]{0}', space=sflag, size = 0x4, scoped, tag = 'scoped memory for tpu_custom_call.1']
    #allocation6 [shape = 'u8[262144]{0}', space=vmem, size = 0x40000, scoped, tag = 'input window, operand 2, single buffered']
    #allocation7 [shape = 's32[1]{0}', space=sflag, size = 0x4, scoped, tag = 'scoped memory for tpu_custom_call.1']
    #allocation8 [shape = 'u8[4096]{0}', space=vmem, size = 0x1000, scoped, tag = 'output window, operand 0, single buffered']
    %10 = vsyncpa [#allocation4], 0
    %11 = vsyncpa [#allocation7], 0
    %12 = vsyncpa [#allocation5], 0
    // Predicated region
    $region2: #{tpu_custom_call.1} parent=1 // pred_check
      _
    $region3: #{tpu_custom_call.1} parent=1 // pred_check_branch
      %14 = sbr.rel (0) target = $region5
    $region4: #{tpu_custom_call.1} parent=1 // pred_region
      _
    $region5: #{tpu_custom_call.1} parent=1 // pred_fallthru
      _
    // Predicated region
    $region6: #{tpu_custom_call.1} parent=1 // pred_check
      _
    $region7: #{tpu_custom_call.1} parent=1 // pred_check_branch
      %16 = sbr.rel (0) target = $region9
    $region8: #{tpu_custom_call.1} parent=1 // pred_region
      %s18 = ssub.s32 1024, 256
      %19 = vsyncadd [#allocation4], %s18
      %s20 = sshll.u32 [#allocation3], 4
      %s21 = int_to_ptr.vmem [resolvable:$true] %s20
      %26 = dma.hbm_to_vmem [thread:$0]  %s1, 256, %s21, [#allocation4], 256, 256, 16
    $region9: #{tpu_custom_call.1} parent=1 // pred_fallthru
      _
    // Predicated region
    $region10: #{tpu_custom_call.1} parent=1 // pred_check
      _
    $region11: #{tpu_custom_call.1} parent=1 // pred_check_branch
      %28 = sbr.rel (0) target = $region13
    $region12: #{tpu_custom_call.1} parent=1 // pred_region
      %s30 = ssub.s32 8192, 8192
      %31 = vsyncadd [#allocation7], %s30
      %s32 = sshll.u32 [#allocation6], 4
      %s33 = int_to_ptr.vmem [resolvable:$true] %s32
      %38 = dma.hbm_to_vmem [thread:$0]  %s2, 8192, %s33, [#allocation7], 64, 64, 4
    $region13: #{tpu_custom_call.1} parent=1 // pred_fallthru
      _
    // Predicated region
    $region14: #{tpu_custom_call.1} parent=1 // pred_check
      _
    $region15: #{tpu_custom_call.1} parent=1 // pred_check_branch
      %40 = sbr.rel (0) target = $region17
    $region16: #{tpu_custom_call.1} parent=1 // pred_region
      _
    $region17: #{tpu_custom_call.1} parent=1 // pred_fallthru
      _
    // Predicated region
    $region18: #{tpu_custom_call.1} parent=1 // pred_check
      _
    $region19: #{tpu_custom_call.1} parent=1 // pred_check_branch
      %42 = sbr.rel (0) target = $region21
    $region20: #{tpu_custom_call.1} parent=1 // pred_region
      %43 = dma.done [#allocation4], 1024
    $region21: #{tpu_custom_call.1} parent=1 // pred_fallthru
      _
    // Predicated region
    $region22: #{tpu_custom_call.1} parent=1 // pred_check
      _
    $region23: #{tpu_custom_call.1} parent=1 // pred_check_branch
      %45 = sbr.rel (0) target = $region25
    $region24: #{tpu_custom_call.1} parent=1 // pred_region
      %46 = dma.done [#allocation7], 8192
    $region25: #{tpu_custom_call.1} parent=1 // pred_fallthru
      _
    %p48 = scmp.eq.s32.totalorder 0, 0
    // Predicated region
    $region26: #{tpu_custom_call.1} parent=1 // pred_check
      %p49 = pneg %p48
    $region27: #{tpu_custom_call.1} parent=1 // pred_check_branch
      %51 = sbr.rel (%p49) target = $region29
    $region28: #{tpu_custom_call.1} parent=1 // pred_region
      %v52 = vld [vmem:[%s3] sm:$0x1]
      %v54 = vlaneseq
      %v55 = vshrl.u32 %v54, 7
      %v56 = vsub.s32 0, %v55
      %v57 = vrot.slane %v52, %v56
      %59 = vst [vmem:[#allocation8] sm:$0xff] %v57
    $region29: #{tpu_custom_call.1} parent=1 // pred_fallthru
      _
    %v60 = vld [vmem:[#allocation3] sm:$0xff]
    %v61 = vld [vmem:[#allocation3 + $0x8] sm:$0xff]
    %v62 = vld [vmem:[#allocation3 + $0x10] sm:$0xff]
    %v63 = vld [vmem:[#allocation3 + $0x18] sm:$0xff]
    %v64 = vld [vmem:[#allocation3 + $0x20] sm:$0xff]
    %v65 = vld [vmem:[#allocation3 + $0x28] sm:$0xff]
    %v66 = vld [vmem:[#allocation3 + $0x30] sm:$0xff]
    %v67 = vld [vmem:[#allocation3 + $0x38] sm:$0xff]
    %v76 = vcombine.low %v60, %v62
    %v77 = vcombine.high %v60, %v62
    %v78 = vcombine.low %v64, %v66
    %v79 = vcombine.high %v64, %v66
    %v81 = vunpack.c.l.s4 1983009808
    %v82 = vunpack.c.0.s8 %v81
    %v83 = vlaneseq
    %v84 = vshrl.u32 %v83, 7
    %v85 = vsub.s32 %v82, %v84
    %v86 = vrot.slane %v76, %v85
    %v88 = vunpack.c.l.s4 1983009808
    %v89 = vunpack.c.0.s8 %v88
    %v90 = vlaneseq
    %v91 = vshrl.u32 %v90, 7
    %v92 = vsub.s32 %v89, %v91
    %v93 = vrot.slane %v77, %v92
    %v95 = vunpack.c.l.s4 1983009808
    %v96 = vunpack.c.0.s8 %v95
    %v97 = vlaneseq
    %v98 = vshrl.u32 %v97, 7
    %v99 = vsub.s32 %v96, %v98
    %v100 = vrot.slane %v78, %v99
    %v102 = vunpack.c.l.s4 1983009808
    %v103 = vunpack.c.0.s8 %v102
    %v104 = vlaneseq
    %v105 = vshrl.u32 %v104, 7
    %v106 = vsub.s32 %v103, %v105
    %v107 = vrot.slane %v79, %v106
    %v108 = vcombine.low %v86, %v100
    %v109 = vcombine.high %v86, %v100
    %v110 = vcombine.low %v93, %v107
    %v111 = vcombine.high %v93, %v107
    %v112 = vcombine.low %v61, %v63
    %v113 = vcombine.high %v61, %v63
    %v114 = vcombine.low %v65, %v67
    %v115 = vcombine.high %v65, %v67
    %v117 = vunpack.c.l.s4 1983009808
    %v118 = vunpack.c.0.s8 %v117
    %v119 = vlaneseq
    %v120 = vshrl.u32 %v119, 7
    %v121 = vsub.s32 %v118, %v120
    %v122 = vrot.slane %v112, %v121
    %v124 = vunpack.c.l.s4 1983009808
    %v125 = vunpack.c.0.s8 %v124
    %v126 = vlaneseq
    %v127 = vshrl.u32 %v126, 7
    %v128 = vsub.s32 %v125, %v127
    %v129 = vrot.slane %v113, %v128
    %v131 = vunpack.c.l.s4 1983009808
    %v132 = vunpack.c.0.s8 %v131
    %v133 = vlaneseq
    %v134 = vshrl.u32 %v133, 7
    %v135 = vsub.s32 %v132, %v134
    %v136 = vrot.slane %v114, %v135
    %v138 = vunpack.c.l.s4 1983009808
    %v139 = vunpack.c.0.s8 %v138
    %v140 = vlaneseq
    %v141 = vshrl.u32 %v140, 7
    %v142 = vsub.s32 %v139, %v141
    %v143 = vrot.slane %v115, %v142
    %v144 = vcombine.low %v122, %v136
    %v145 = vcombine.high %v122, %v136
    %v146 = vcombine.low %v129, %v143
    %v147 = vcombine.high %v129, %v143
    %v156 = vpack.c.bf16 %v108, %v108
    %v157 = vpack.c.bf16 %v109, %v109
    %v158 = vpack.c.bf16 %v110, %v110
    %v159 = vpack.c.bf16 %v111, %v111
    %v160 = vpack.c.bf16 %v144, %v144
    %v161 = vpack.c.bf16 %v145, %v145
    %v162 = vpack.c.bf16 %v146, %v146
    %v163 = vpack.c.bf16 %v147, %v147
    %s164 = smul.u32 0, 1024
    %s165 = sshra.s32 %s164, 3
    %s166 = sand.u32 %s164, 7
    %s167 = smul.addr %s165, 4
    %s168 = scalar_lea.vmem [#allocation6], %s167
    %v169 = vld [vmem:[%s168] sm:$0xf]
    %v170 = vld [vmem:[%s168 + $0x4] sm:$0xf]
    %v171 = vld [vmem:[%s168 + $0x8] sm:$0xf]
    %v172 = vld [vmem:[%s168 + $0xc] sm:$0xf]
    %v173 = vld [vmem:[%s168 + $0x10] sm:$0xf]
    %v174 = vld [vmem:[%s168 + $0x14] sm:$0xf]
    %v175 = vld [vmem:[%s168 + $0x18] sm:$0xf]
    %v176 = vld [vmem:[%s168 + $0x1c] sm:$0xf]
    %v177 = vld [vmem:[%s168 + $0x20] sm:$0xf]
    %v178 = vld [vmem:[%s168 + $0x24] sm:$0xf]
    %v179 = vld [vmem:[%s168 + $0x28] sm:$0xf]
    %v180 = vld [vmem:[%s168 + $0x2c] sm:$0xf]
    %v181 = vld [vmem:[%s168 + $0x30] sm:$0xf]
    %v182 = vld [vmem:[%s168 + $0x34] sm:$0xf]
    %v183 = vld [vmem:[%s168 + $0x38] sm:$0xf]
    %v184 = vld [vmem:[%s168 + $0x3c] sm:$0xf]
    %v185 = vld [vmem:[%s168 + $0x40] sm:$0xf]
    %v186 = vld [vmem:[%s168 + $0x44] sm:$0xf]
    %v187 = vld [vmem:[%s168 + $0x48] sm:$0xf]
    %v188 = vld [vmem:[%s168 + $0x4c] sm:$0xf]
    %v189 = vld [vmem:[%s168 + $0x50] sm:$0xf]
    %v190 = vld [vmem:[%s168 + $0x54] sm:$0xf]
    %v191 = vld [vmem:[%s168 + $0x58] sm:$0xf]
    %v192 = vld [vmem:[%s168 + $0x5c] sm:$0xf]
    %v193 = vld [vmem:[%s168 + $0x60] sm:$0xf]
    %v194 = vld [vmem:[%s168 + $0x64] sm:$0xf]
    %v195 = vld [vmem:[%s168 + $0x68] sm:$0xf]
    %v196 = vld [vmem:[%s168 + $0x6c] sm:$0xf]
    %v197 = vld [vmem:[%s168 + $0x70] sm:$0xf]
    %v198 = vld [vmem:[%s168 + $0x74] sm:$0xf]
    %v199 = vld [vmem:[%s168 + $0x78] sm:$0xf]
    %v200 = vld [vmem:[%s168 + $0x7c] sm:$0xf]
    %v201 = vld [vmem:[%s168 + $0x80] sm:$0xf]
    %v202 = vld [vmem:[%s168 + $0x84] sm:$0xf]
    %v203 = vld [vmem:[%s168 + $0x88] sm:$0xf]
    %v204 = vld [vmem:[%s168 + $0x8c] sm:$0xf]
    %v205 = vld [vmem:[%s168 + $0x90] sm:$0xf]
    %v206 = vld [vmem:[%s168 + $0x94] sm:$0xf]
    %v207 = vld [vmem:[%s168 + $0x98] sm:$0xf]
    %v208 = vld [vmem:[%s168 + $0x9c] sm:$0xf]
    %v209 = vld [vmem:[%s168 + $0xa0] sm:$0xf]
    %v210 = vld [vmem:[%s168 + $0xa4] sm:$0xf]
    %v211 = vld [vmem:[%s168 + $0xa8] sm:$0xf]
    %v212 = vld [vmem:[%s168 + $0xac] sm:$0xf]
    %v213 = vld [vmem:[%s168 + $0xb0] sm:$0xf]
    %v214 = vld [vmem:[%s168 + $0xb4] sm:$0xf]
    %v215 = vld [vmem:[%s168 + $0xb8] sm:$0xf]
    %v216 = vld [vmem:[%s168 + $0xbc] sm:$0xf]
    %v217 = vld [vmem:[%s168 + $0xc0] sm:$0xf]
    %v218 = vld [vmem:[%s168 + $0xc4] sm:$0xf]
    %v219 = vld [vmem:[%s168 + $0xc8] sm:$0xf]
    %v220 = vld [vmem:[%s168 + $0xcc] sm:$0xf]
    %v221 = vld [vmem:[%s168 + $0xd0] sm:$0xf]
    %v222 = vld [vmem:[%s168 + $0xd4] sm:$0xf]
    %v223 = vld [vmem:[%s168 + $0xd8] sm:$0xf]
    %v224 = vld [vmem:[%s168 + $0xdc] sm:$0xf]
    %v225 = vld [vmem:[%s168 + $0xe0] sm:$0xf]
    %v226 = vld [vmem:[%s168 + $0xe4] sm:$0xf]
    %v227 = vld [vmem:[%s168 + $0xe8] sm:$0xf]
    %v228 = vld [vmem:[%s168 + $0xec] sm:$0xf]
    %v229 = vld [vmem:[%s168 + $0xf0] sm:$0xf]
    %v230 = vld [vmem:[%s168 + $0xf4] sm:$0xf]
    %v231 = vld [vmem:[%s168 + $0xf8] sm:$0xf]
    %v232 = vld [vmem:[%s168 + $0xfc] sm:$0xf]
    %v233 = vld [vmem:[%s168 + $0x100] sm:$0xf]
    %v234 = vld [vmem:[%s168 + $0x104] sm:$0xf]
    %v235 = vld [vmem:[%s168 + $0x108] sm:$0xf]
    %v236 = vld [vmem:[%s168 + $0x10c] sm:$0xf]
    %v237 = vld [vmem:[%s168 + $0x110] sm:$0xf]
    %v238 = vld [vmem:[%s168 + $0x114] sm:$0xf]
    %v239 = vld [vmem:[%s168 + $0x118] sm:$0xf]
    %v240 = vld [vmem:[%s168 + $0x11c] sm:$0xf]
    %v241 = vld [vmem:[%s168 + $0x120] sm:$0xf]
    %v242 = vld [vmem:[%s168 + $0x124] sm:$0xf]
    %v243 = vld [vmem:[%s168 + $0x128] sm:$0xf]
    %v244 = vld [vmem:[%s168 + $0x12c] sm:$0xf]
    %v245 = vld [vmem:[%s168 + $0x130] sm:$0xf]
    %v246 = vld [vmem:[%s168 + $0x134] sm:$0xf]
    %v247 = vld [vmem:[%s168 + $0x138] sm:$0xf]
    %v248 = vld [vmem:[%s168 + $0x13c] sm:$0xf]
    %v249 = vld [vmem:[%s168 + $0x140] sm:$0xf]
    %v250 = vld [vmem:[%s168 + $0x144] sm:$0xf]
    %v251 = vld [vmem:[%s168 + $0x148] sm:$0xf]
    %v252 = vld [vmem:[%s168 + $0x14c] sm:$0xf]
    %v253 = vld [vmem:[%s168 + $0x150] sm:$0xf]
    %v254 = vld [vmem:[%s168 + $0x154] sm:$0xf]
    %v255 = vld [vmem:[%s168 + $0x158] sm:$0xf]
    %v256 = vld [vmem:[%s168 + $0x15c] sm:$0xf]
    %v257 = vld [vmem:[%s168 + $0x160] sm:$0xf]
    %v258 = vld [vmem:[%s168 + $0x164] sm:$0xf]
    %v259 = vld [vmem:[%s168 + $0x168] sm:$0xf]
    %v260 = vld [vmem:[%s168 + $0x16c] sm:$0xf]
    %v261 = vld [vmem:[%s168 + $0x170] sm:$0xf]
    %v262 = vld [vmem:[%s168 + $0x174] sm:$0xf]
    %v263 = vld [vmem:[%s168 + $0x178] sm:$0xf]
    %v264 = vld [vmem:[%s168 + $0x17c] sm:$0xf]
    %v265 = vld [vmem:[%s168 + $0x180] sm:$0xf]
    %v266 = vld [vmem:[%s168 + $0x184] sm:$0xf]
    %v267 = vld [vmem:[%s168 + $0x188] sm:$0xf]
    %v268 = vld [vmem:[%s168 + $0x18c] sm:$0xf]
    %v269 = vld [vmem:[%s168 + $0x190] sm:$0xf]
    %v270 = vld [vmem:[%s168 + $0x194] sm:$0xf]
    %v271 = vld [vmem:[%s168 + $0x198] sm:$0xf]
    %v272 = vld [vmem:[%s168 + $0x19c] sm:$0xf]
    %v273 = vld [vmem:[%s168 + $0x1a0] sm:$0xf]
    %v274 = vld [vmem:[%s168 + $0x1a4] sm:$0xf]
    %v275 = vld [vmem:[%s168 + $0x1a8] sm:$0xf]
    %v276 = vld [vmem:[%s168 + $0x1ac] sm:$0xf]
    %v277 = vld [vmem:[%s168 + $0x1b0] sm:$0xf]
    %v278 = vld [vmem:[%s168 + $0x1b4] sm:$0xf]
    %v279 = vld [vmem:[%s168 + $0x1b8] sm:$0xf]
    %v280 = vld [vmem:[%s168 + $0x1bc] sm:$0xf]
    %v281 = vld [vmem:[%s168 + $0x1c0] sm:$0xf]
    %v282 = vld [vmem:[%s168 + $0x1c4] sm:$0xf]
    %v283 = vld [vmem:[%s168 + $0x1c8] sm:$0xf]
    %v284 = vld [vmem:[%s168 + $0x1cc] sm:$0xf]
    %v285 = vld [vmem:[%s168 + $0x1d0] sm:$0xf]
    %v286 = vld [vmem:[%s168 + $0x1d4] sm:$0xf]
    %v287 = vld [vmem:[%s168 + $0x1d8] sm:$0xf]
    %v288 = vld [vmem:[%s168 + $0x1dc] sm:$0xf]
    %v289 = vld [vmem:[%s168 + $0x1e0] sm:$0xf]
    %v290 = vld [vmem:[%s168 + $0x1e4] sm:$0xf]
    %v291 = vld [vmem:[%s168 + $0x1e8] sm:$0xf]
    %v292 = vld [vmem:[%s168 + $0x1ec] sm:$0xf]
    %v293 = vld [vmem:[%s168 + $0x1f0] sm:$0xf]
    %v294 = vld [vmem:[%s168 + $0x1f4] sm:$0xf]
    %v295 = vld [vmem:[%s168 + $0x1f8] sm:$0xf]
    %v296 = vld [vmem:[%s168 + $0x1fc] sm:$0xf]
    %v297 = vld [vmem:[#allocation8] sm:$0xff]
    %v426 = vunpack.c.l.b16 %v169
    %v427 = vunpack.c.l.b16 %v170
    %v428 = vunpack.c.l.b16 %v171
    %v429 = vunpack.c.l.b16 %v172
    %v430 = vunpack.c.l.b16 %v173
    %v431 = vunpack.c.l.b16 %v174
    %v432 = vunpack.c.l.b16 %v175
    %v433 = vunpack.c.l.b16 %v176
    %v434 = vunpack.c.l.b16 %v177
    %v435 = vunpack.c.l.b16 %v178
    %v436 = vunpack.c.l.b16 %v179
    %v437 = vunpack.c.l.b16 %v180
    %v438 = vunpack.c.l.b16 %v181
    %v439 = vunpack.c.l.b16 %v182
    %v440 = vunpack.c.l.b16 %v183
    %v441 = vunpack.c.l.b16 %v184
    %v442 = vunpack.c.l.b16 %v185
    %v443 = vunpack.c.l.b16 %v186
    %v444 = vunpack.c.l.b16 %v187
    %v445 = vunpack.c.l.b16 %v188
    %v446 = vunpack.c.l.b16 %v189
    %v447 = vunpack.c.l.b16 %v190
    %v448 = vunpack.c.l.b16 %v191
    %v449 = vunpack.c.l.b16 %v192
    %v450 = vunpack.c.l.b16 %v193
    %v451 = vunpack.c.l.b16 %v194
    %v452 = vunpack.c.l.b16 %v195
    %v453 = vunpack.c.l.b16 %v196
    %v454 = vunpack.c.l.b16 %v197
    %v455 = vunpack.c.l.b16 %v198
    %v456 = vunpack.c.l.b16 %v199
    %v457 = vunpack.c.l.b16 %v200
    %v458 = vunpack.c.l.b16 %v201
    %v459 = vunpack.c.l.b16 %v202
    %v460 = vunpack.c.l.b16 %v203
    %v461 = vunpack.c.l.b16 %v204
    %v462 = vunpack.c.l.b16 %v205
    %v463 = vunpack.c.l.b16 %v206
    %v464 = vunpack.c.l.b16 %v207
    %v465 = vunpack.c.l.b16 %v208
    %v466 = vunpack.c.l.b16 %v209
    %v467 = vunpack.c.l.b16 %v210
    %v468 = vunpack.c.l.b16 %v211
    %v469 = vunpack.c.l.b16 %v212
    %v470 = vunpack.c.l.b16 %v213
    %v471 = vunpack.c.l.b16 %v214
    %v472 = vunpack.c.l.b16 %v215
    %v473 = vunpack.c.l.b16 %v216
    %v474 = vunpack.c.l.b16 %v217
    %v475 = vunpack.c.l.b16 %v218
    %v476 = vunpack.c.l.b16 %v219
    %v477 = vunpack.c.l.b16 %v220
    %v478 = vunpack.c.l.b16 %v221
    %v479 = vunpack.c.l.b16 %v222
    %v480 = vunpack.c.l.b16 %v223
    %v481 = vunpack.c.l.b16 %v224
    %v482 = vunpack.c.l.b16 %v225
    %v483 = vunpack.c.l.b16 %v226
    %v484 = vunpack.c.l.b16 %v227
    %v485 = vunpack.c.l.b16 %v228
    %v486 = vunpack.c.l.b16 %v229
    %v487 = vunpack.c.l.b16 %v230
    %v488 = vunpack.c.l.b16 %v231
    %v489 = vunpack.c.l.b16 %v232
    %v490 = vunpack.c.l.b16 %v233
    %v491 = vunpack.c.l.b16 %v234
    %v492 = vunpack.c.l.b16 %v235
    %v493 = vunpack.c.l.b16 %v236
    %v494 = vunpack.c.l.b16 %v237
    %v495 = vunpack.c.l.b16 %v238
    %v496 = vunpack.c.l.b16 %v239
    %v497 = vunpack.c.l.b16 %v240
    %v498 = vunpack.c.l.b16 %v241
    %v499 = vunpack.c.l.b16 %v242
    %v500 = vunpack.c.l.b16 %v243
    %v501 = vunpack.c.l.b16 %v244
    %v502 = vunpack.c.l.b16 %v245
    %v503 = vunpack.c.l.b16 %v246
    %v504 = vunpack.c.l.b16 %v247
    %v505 = vunpack.c.l.b16 %v248
    %v506 = vunpack.c.l.b16 %v249
    %v507 = vunpack.c.l.b16 %v250
    %v508 = vunpack.c.l.b16 %v251
    %v509 = vunpack.c.l.b16 %v252
    %v510 = vunpack.c.l.b16 %v253
    %v511 = vunpack.c.l.b16 %v254
    %v512 = vunpack.c.l.b16 %v255
    %v513 = vunpack.c.l.b16 %v256
    %v514 = vunpack.c.l.b16 %v257
    %v515 = vunpack.c.l.b16 %v258
    %v516 = vunpack.c.l.b16 %v259
    %v517 = vunpack.c.l.b16 %v260
    %v518 = vunpack.c.l.b16 %v261
    %v519 = vunpack.c.l.b16 %v262
    %v520 = vunpack.c.l.b16 %v263
    %v521 = vunpack.c.l.b16 %v264
    %v522 = vunpack.c.l.b16 %v265
    %v523 = vunpack.c.l.b16 %v266
    %v524 = vunpack.c.l.b16 %v267
    %v525 = vunpack.c.l.b16 %v268
    %v526 = vunpack.c.l.b16 %v269
    %v527 = vunpack.c.l.b16 %v270
    %v528 = vunpack.c.l.b16 %v271
    %v529 = vunpack.c.l.b16 %v272
    %v530 = vunpack.c.l.b16 %v273
    %v531 = vunpack.c.l.b16 %v274
    %v532 = vunpack.c.l.b16 %v275
    %v533 = vunpack.c.l.b16 %v276
    %v534 = vunpack.c.l.b16 %v277
    %v535 = vunpack.c.l.b16 %v278
    %v536 = vunpack.c.l.b16 %v279
    %v537 = vunpack.c.l.b16 %v280
    %v538 = vunpack.c.l.b16 %v281
    %v539 = vunpack.c.l.b16 %v282
    %v540 = vunpack.c.l.b16 %v283
    %v541 = vunpack.c.l.b16 %v284
    %v542 = vunpack.c.l.b16 %v285
    %v543 = vunpack.c.l.b16 %v286
    %v544 = vunpack.c.l.b16 %v287
    %v545 = vunpack.c.l.b16 %v288
    %v546 = vunpack.c.l.b16 %v289
    %v547 = vunpack.c.l.b16 %v290
    %v548 = vunpack.c.l.b16 %v291
    %v549 = vunpack.c.l.b16 %v292
    %v550 = vunpack.c.l.b16 %v293
    %v551 = vunpack.c.l.b16 %v294
    %v552 = vunpack.c.l.b16 %v295
    %v553 = vunpack.c.l.b16 %v296
    %v554 = vpack.c.b16 %v427, %v426
    %v555 = vpack.c.b16 %v429, %v428
    %v556 = vpack.c.b16 %v431, %v430
    %v557 = vpack.c.b16 %v433, %v432
    %v558 = vpack.c.b16 %v435, %v434
    %v559 = vpack.c.b16 %v437, %v436
    %v560 = vpack.c.b16 %v439, %v438
    %v561 = vpack.c.b16 %v441, %v440
    %v562 = vpack.c.b16 %v443, %v442
    %v563 = vpack.c.b16 %v445, %v444
    %v564 = vpack.c.b16 %v447, %v446
    %v565 = vpack.c.b16 %v449, %v448
    %v566 = vpack.c.b16 %v451, %v450
    %v567 = vpack.c.b16 %v453, %v452
    %v568 = vpack.c.b16 %v455, %v454
    %v569 = vpack.c.b16 %v457, %v456
    %v570 = vpack.c.b16 %v459, %v458
    %v571 = vpack.c.b16 %v461, %v460
    %v572 = vpack.c.b16 %v463, %v462
    %v573 = vpack.c.b16 %v465, %v464
    %v574 = vpack.c.b16 %v467, %v466
    %v575 = vpack.c.b16 %v469, %v468
    %v576 = vpack.c.b16 %v471, %v470
    %v577 = vpack.c.b16 %v473, %v472
    %v578 = vpack.c.b16 %v475, %v474
    %v579 = vpack.c.b16 %v477, %v476
    %v580 = vpack.c.b16 %v479, %v478
    %v581 = vpack.c.b16 %v481, %v480
    %v582 = vpack.c.b16 %v483, %v482
    %v583 = vpack.c.b16 %v485, %v484
    %v584 = vpack.c.b16 %v487, %v486
    %v585 = vpack.c.b16 %v489, %v488
    %v586 = vpack.c.b16 %v491, %v490
    %v587 = vpack.c.b16 %v493, %v492
    %v588 = vpack.c.b16 %v495, %v494
    %v589 = vpack.c.b16 %v497, %v496
    %v590 = vpack.c.b16 %v499, %v498
    %v591 = vpack.c.b16 %v501, %v500
    %v592 = vpack.c.b16 %v503, %v502
    %v593 = vpack.c.b16 %v505, %v504
    %v594 = vpack.c.b16 %v507, %v506
    %v595 = vpack.c.b16 %v509, %v508
    %v596 = vpack.c.b16 %v511, %v510
    %v597 = vpack.c.b16 %v513, %v512
    %v598 = vpack.c.b16 %v515, %v514
    %v599 = vpack.c.b16 %v517, %v516
    %v600 = vpack.c.b16 %v519, %v518
    %v601 = vpack.c.b16 %v521, %v520
    %v602 = vpack.c.b16 %v523, %v522
    %v603 = vpack.c.b16 %v525, %v524
    %v604 = vpack.c.b16 %v527, %v526
    %v605 = vpack.c.b16 %v529, %v528
    %v606 = vpack.c.b16 %v531, %v530
    %v607 = vpack.c.b16 %v533, %v532
    %v608 = vpack.c.b16 %v535, %v534
    %v609 = vpack.c.b16 %v537, %v536
    %v610 = vpack.c.b16 %v539, %v538
    %v611 = vpack.c.b16 %v541, %v540
    %v612 = vpack.c.b16 %v543, %v542
    %v613 = vpack.c.b16 %v545, %v544
    %v614 = vpack.c.b16 %v547, %v546
    %v615 = vpack.c.b16 %v549, %v548
    %v616 = vpack.c.b16 %v551, %v550
    %v617 = vpack.c.b16 %v553, %v552
    %682 = vmatprep.subr.bf16.mxu0 0
    %683 = vmatpush1.bf16.msra.mxu0 %v554
    %684 = vmatprep.subr.bf16.mxu0 0
    %685 = vmatpush1.bf16.msra.mxu0 %v555
    %686 = vmatprep.subr.bf16.mxu0 0
    %687 = vmatpush1.bf16.msra.mxu0 %v556
    %688 = vmatprep.subr.bf16.mxu0 0
    %689 = vmatpush1.bf16.msra.mxu0 %v557
    %690 = vmatprep.subr.bf16.mxu0 0
    %691 = vmatpush1.bf16.msra.mxu0 %v558
    %692 = vmatprep.subr.bf16.mxu0 0
    %693 = vmatpush1.bf16.msra.mxu0 %v559
    %694 = vmatprep.subr.bf16.mxu0 0
    %695 = vmatpush1.bf16.msra.mxu0 %v560
    %696 = vmatprep.subr.bf16.mxu0 0
    %697 = vmatpush1.bf16.msra.mxu0 %v561
    %698 = vmatprep.subr.bf16.mxu0 0
    %699 = vmatpush1.bf16.msra.mxu0 %v562
    %700 = vmatprep.subr.bf16.mxu0 0
    %701 = vmatpush1.bf16.msra.mxu0 %v563
    %702 = vmatprep.subr.bf16.mxu0 0
    %703 = vmatpush1.bf16.msra.mxu0 %v564
    %704 = vmatprep.subr.bf16.mxu0 0
    %705 = vmatpush1.bf16.msra.mxu0 %v565
    %706 = vmatprep.subr.bf16.mxu0 0
    %707 = vmatpush1.bf16.msra.mxu0 %v566
    %708 = vmatprep.subr.bf16.mxu0 0
    %709 = vmatpush1.bf16.msra.mxu0 %v567
    %710 = vmatprep.subr.bf16.mxu0 0
    %711 = vmatpush1.bf16.msra.mxu0 %v568
    %712 = vmatprep.subr.bf16.mxu0 0
    %713 = vmatpush1.bf16.msra.mxu0 %v569
    %714 = vmatprep.mubr.bf16.mxu0 %v157
    %715 = vmatmul.mubr.bf16.gmra.mrb[0].mxu0 %v156
    %v716 = vpop.f32.mrb[0].mxu0
    %v717 = vadd.f32 0.0, %v716
    %v718 = vpop.f32.mrb[0].mxu0
    %v719 = vpop.f32.mrb[0].mxu0
    %v720 = vpop.f32.mrb[0].mxu0
    %721 = vdwg.mxu0
    %722 = vmatprep.subr.bf16.mxu0 0
    %723 = vmatpush1.bf16.msra.mxu0 %v570
    %724 = vmatprep.subr.bf16.mxu0 0
    %725 = vmatpush1.bf16.msra.mxu0 %v571
    %726 = vmatprep.subr.bf16.mxu0 0
    %727 = vmatpush1.bf16.msra.mxu0 %v572
    %728 = vmatprep.subr.bf16.mxu0 0
    %729 = vmatpush1.bf16.msra.mxu0 %v573
    %730 = vmatprep.subr.bf16.mxu0 0
    %731 = vmatpush1.bf16.msra.mxu0 %v574
    %732 = vmatprep.subr.bf16.mxu0 0
    %733 = vmatpush1.bf16.msra.mxu0 %v575
    %734 = vmatprep.subr.bf16.mxu0 0
    %735 = vmatpush1.bf16.msra.mxu0 %v576
    %736 = vmatprep.subr.bf16.mxu0 0
    %737 = vmatpush1.bf16.msra.mxu0 %v577
    %738 = vmatprep.subr.bf16.mxu0 0
    %739 = vmatpush1.bf16.msra.mxu0 %v578
    %740 = vmatprep.subr.bf16.mxu0 0
    %741 = vmatpush1.bf16.msra.mxu0 %v579
    %742 = vmatprep.subr.bf16.mxu0 0
    %743 = vmatpush1.bf16.msra.mxu0 %v580
    %744 = vmatprep.subr.bf16.mxu0 0
    %745 = vmatpush1.bf16.msra.mxu0 %v581
    %746 = vmatprep.subr.bf16.mxu0 0
    %747 = vmatpush1.bf16.msra.mxu0 %v582
    %748 = vmatprep.subr.bf16.mxu0 0
    %749 = vmatpush1.bf16.msra.mxu0 %v583
    %750 = vmatprep.subr.bf16.mxu0 0
    %751 = vmatpush1.bf16.msra.mxu0 %v584
    %752 = vmatprep.subr.bf16.mxu0 0
    %753 = vmatpush1.bf16.msra.mxu0 %v585
    %754 = vmatprep.mubr.bf16.mxu0 %v159
    %755 = vmatmul.mubr.bf16.gmra.mrb[0].mxu0 %v158
    %v756 = vpop.f32.mrb[0].mxu0
    %v757 = vadd.f32 %v717, %v756
    %v758 = vpop.f32.mrb[0].mxu0
    %v759 = vpop.f32.mrb[0].mxu0
    %v760 = vpop.f32.mrb[0].mxu0
    %761 = vdwg.mxu0
    %762 = vmatprep.subr.bf16.mxu0 0
    %763 = vmatpush1.bf16.msra.mxu0 %v586
    %764 = vmatprep.subr.bf16.mxu0 0
    %765 = vmatpush1.bf16.msra.mxu0 %v587
    %766 = vmatprep.subr.bf16.mxu0 0
    %767 = vmatpush1.bf16.msra.mxu0 %v588
    %768 = vmatprep.subr.bf16.mxu0 0
    %769 = vmatpush1.bf16.msra.mxu0 %v589
    %770 = vmatprep.subr.bf16.mxu0 0
    %771 = vmatpush1.bf16.msra.mxu0 %v590
    %772 = vmatprep.subr.bf16.mxu0 0
    %773 = vmatpush1.bf16.msra.mxu0 %v591
    %774 = vmatprep.subr.bf16.mxu0 0
    %775 = vmatpush1.bf16.msra.mxu0 %v592
    %776 = vmatprep.subr.bf16.mxu0 0
    %777 = vmatpush1.bf16.msra.mxu0 %v593
    %778 = vmatprep.subr.bf16.mxu0 0
    %779 = vmatpush1.bf16.msra.mxu0 %v594
    %780 = vmatprep.subr.bf16.mxu0 0
    %781 = vmatpush1.bf16.msra.mxu0 %v595
    %782 = vmatprep.subr.bf16.mxu0 0
    %783 = vmatpush1.bf16.msra.mxu0 %v596
    %784 = vmatprep.subr.bf16.mxu0 0
    %785 = vmatpush1.bf16.msra.mxu0 %v597
    %786 = vmatprep.subr.bf16.mxu0 0
    %787 = vmatpush1.bf16.msra.mxu0 %v598
    %788 = vmatprep.subr.bf16.mxu0 0
    %789 = vmatpush1.bf16.msra.mxu0 %v599
    %790 = vmatprep.subr.bf16.mxu0 0
    %791 = vmatpush1.bf16.msra.mxu0 %v600
    %792 = vmatprep.subr.bf16.mxu0 0
    %793 = vmatpush1.bf16.msra.mxu0 %v601
    %794 = vmatprep.mubr.bf16.mxu0 %v161
    %795 = vmatmul.mubr.bf16.gmra.mrb[0].mxu0 %v160
    %v796 = vpop.f32.mrb[0].mxu0
    %v797 = vadd.f32 %v757, %v796
    %v798 = vpop.f32.mrb[0].mxu0
    %v799 = vpop.f32.mrb[0].mxu0
    %v800 = vpop.f32.mrb[0].mxu0
    %801 = vdwg.mxu0
    %802 = vmatprep.subr.bf16.mxu0 0
    %803 = vmatpush1.bf16.msra.mxu0 %v602
    %804 = vmatprep.subr.bf16.mxu0 0
    %805 = vmatpush1.bf16.msra.mxu0 %v603
    %806 = vmatprep.subr.bf16.mxu0 0
    %807 = vmatpush1.bf16.msra.mxu0 %v604
    %808 = vmatprep.subr.bf16.mxu0 0
    %809 = vmatpush1.bf16.msra.mxu0 %v605
    %810 = vmatprep.subr.bf16.mxu0 0
    %811 = vmatpush1.bf16.msra.mxu0 %v606
    %812 = vmatprep.subr.bf16.mxu0 0
    %813 = vmatpush1.bf16.msra.mxu0 %v607
    %814 = vmatprep.subr.bf16.mxu0 0
    %815 = vmatpush1.bf16.msra.mxu0 %v608
    %816 = vmatprep.subr.bf16.mxu0 0
    %817 = vmatpush1.bf16.msra.mxu0 %v609
    %818 = vmatprep.subr.bf16.mxu0 0
    %819 = vmatpush1.bf16.msra.mxu0 %v610
    %820 = vmatprep.subr.bf16.mxu0 0
    %821 = vmatpush1.bf16.msra.mxu0 %v611
    %822 = vmatprep.subr.bf16.mxu0 0
    %823 = vmatpush1.bf16.msra.mxu0 %v612
    %824 = vmatprep.subr.bf16.mxu0 0
    %825 = vmatpush1.bf16.msra.mxu0 %v613
    %826 = vmatprep.subr.bf16.mxu0 0
    %827 = vmatpush1.bf16.msra.mxu0 %v614
    %828 = vmatprep.subr.bf16.mxu0 0
    %829 = vmatpush1.bf16.msra.mxu0 %v615
    %830 = vmatprep.subr.bf16.mxu0 0
    %831 = vmatpush1.bf16.msra.mxu0 %v616
    %832 = vmatprep.subr.bf16.mxu0 0
    %833 = vmatpush1.bf16.msra.mxu0 %v617
    %834 = vmatprep.mubr.bf16.mxu0 %v163
    %835 = vmatmul.mubr.bf16.gmra.mrb[0].mxu0 %v162
    %v836 = vpop.f32.mrb[0].mxu0
    %v837 = vadd.f32 %v797, %v836
    %v838 = vpop.f32.mrb[0].mxu0
    %v839 = vpop.f32.mrb[0].mxu0
    %v840 = vpop.f32.mrb[0].mxu0
    %841 = vdwg.mxu0
    %v842 = vadd.f32 %v297, %v837
    %843 = vst [vmem:[#allocation8] sm:$0xff] %v842
    // Predicated region
    $region30: #{tpu_custom_call.1} parent=1 // pred_check
      %p844 = pneg %p48
    $region31: #{tpu_custom_call.1} parent=1 // pred_check_branch
      %846 = sbr.rel (%p844) target = $region33
    $region32: #{tpu_custom_call.1} parent=1 // pred_region
      %v847 = vld [vmem:[#allocation8] sm:$0xff]
      %s848 = sld [smem:[#allocation2]]
      %s849 = ssub.f32 0.0, %s848
      %v850 = vstv %s849
      %v851 = vmul.f32 %v850, 1.442695
      %v852 = vpow.pop %v851
      %s853 = vtos %v852
      %v854 = vstv %s853
      %v855 = vmul.f32 %v847, %v854
      %856 = vst [vmem:[#allocation8] sm:$0xff] %v855
    $region33: #{tpu_custom_call.1} parent=1 // pred_fallthru
      _
    // Predicated region
    $region34: #{tpu_custom_call.1} parent=1 // pred_check
      _
    $region35: #{tpu_custom_call.1} parent=1 // pred_check_branch
      %858 = sbr.rel (0) target = $region37
    $region36: #{tpu_custom_call.1} parent=1 // pred_region
      %s860 = ssub.s32 128, 32
      %861 = vsyncadd [#allocation5], %s860
      %s862 = sshll.u32 [#allocation8], 4
      %s863 = int_to_ptr.vmem [resolvable:$true] %s862
      %868 = dma.vmem_to_hbm [thread:$0]  %s863, 32, %s4, [#allocation5], 32, 32, 2
    $region37: #{tpu_custom_call.1} parent=1 // pred_fallthru
      _
    // Predicated region
    $region38: #{tpu_custom_call.1} parent=1 // pred_check
      _
    $region39: #{tpu_custom_call.1} parent=1 // pred_check_branch
      %870 = sbr.rel (0) target = $region41
    $region40: #{tpu_custom_call.1} parent=1 // pred_region
      %871 = dma.done [#allocation5], 128
    $region41: #{tpu_custom_call.1} parent=1 // pred_fallthru
      _
    %872 = vsyncpa [#allocation4], 1
    %873 = vsyncpa [#allocation7], 1
    %874 = vsyncpa [#allocation5], 1

</llo_original>
